<compile_context>
chip_gen: v6e
topology: v6e:2x2x1
jax: 0.10.0
libtpu: 0.0.40
codegen_flags: <defaults>
</compile_context>

<pallas_src>
import math

import jax
import jax.numpy as jnp
from jax.experimental import pallas as pl
from jax.experimental.pallas import tpu as pltpu


def _cdiv(a, b):
    return -(-a // b)


def _round_up(x, m):
    return _cdiv(x, m) * m


def _round_down(x, m):
    return (x // m) * m


def _sublane_min(dtype):
    # Packed sublane minimum: f32 -> 8, bf16/f16 -> 16, int8/fp8 -> 32.
    return max(8, 32 // jnp.dtype(dtype).itemsize)


def _vmem_budget():
    """Returns (usable_bytes_for_kernel_buffers, physical_capacity_bytes)."""
    cap = 128 << 20
    try:
        cap = int(getattr(pltpu.get_tpu_info(), "vmem_capacity_bytes", cap))
    except Exception:
        pass  # fall back to 128 MiB if the query is unavailable
    if cap <= (64 << 20):            # v7x: 64 MiB per TensorCore
        usable = min(48 << 20, cap - (8 << 20))
    else:                            # v5e / v6e: 128 MiB
        usable = min(100 << 20, cap - (16 << 20))
    return usable, cap


def _choose_plan(M, K, N, xs, ws, os, bias_itemsize, acc_in_output, budget, tm_align):
    """Pick (mode, tm, tn, tk). mode is 'collapsed' (tk=K) or 'tiled'."""
    narrow = max(xs, ws) <= 2                      # bf16 / fp8 / int8 operands
    t_def = (1024 if budget >= (80 << 20) else 768) if narrow else 512
    tk_def = 1024 if narrow else 512

    def clamp_tm(t):
        return M if M <= t else max(tm_align, _round_down(t, tm_align))

    def clamp_tn(t):
        return N if N <= t else max(128, _round_down(t, 128))

    def collapsed_bytes(tm, tn):
        b = 2 * (tm * K * xs + K * tn * ws + tm * tn * os)
        if bias_itemsize:
            b += 2 * tn * bias_itemsize
        return b

    def tiled_bytes(tm, tn, tk):
        b = 2 * (tm * tk * xs + tk * tn * ws + tm * tn * os)
        if bias_itemsize:
            b += 2 * tn * bias_itemsize
        if not acc_in_output:
            b += tm * tn * 4                       # f32 scratch accumulator
        return b

    # Preferred: collapse K so every output tile is a single dot and one
    # operand can stay HBM-read-once.
    tm, tn = clamp_tm(t_def), clamp_tn(t_def)
    for _ in range(10):
        if collapsed_bytes(tm, tn) <= budget:
            return "collapsed", tm, tn, K
        if tn >= tm and tn > 128:
            tn = clamp_tn(max(128, tn // 2))
        elif tm > tm_align and tm > 8:
            tm = clamp_tm(max(tm_align, tm // 2))
        else:
            break

    # Fallback for very large K: tile the contraction axis.
    tm, tn = clamp_tm(t_def), clamp_tn(t_def)
    tk = min(tk_def, _round_up(K, 128))
    for _ in range(16):
        if tiled_bytes(tm, tn, tk) <= budget:
            break
        if tk > 512:
            tk = max(512, _round_down(tk // 2, 128))
        elif tn >= tm and tn > 128:
            tn = clamp_tn(max(128, tn // 2))
        elif tm > tm_align and tm > 8:
            tm = clamp_tm(max(tm_align, tm // 2))
        else:
            break
    return "tiled", tm, tn, tk


def _collapsed_kernel(has_bias):
    if has_bias:
        def kernel(x_ref, w_ref, b_ref, o_ref):
            acc = jnp.dot(x_ref[...], w_ref[...],
                          preferred_element_type=jnp.float32)
            o_ref[...] = (acc + b_ref[...].astype(jnp.float32)).astype(o_ref.dtype)
    else:
        def kernel(x_ref, w_ref, o_ref):
            acc = jnp.dot(x_ref[...], w_ref[...],
                          preferred_element_type=jnp.float32)
            o_ref[...] = acc.astype(o_ref.dtype)
    return kernel


def _tiled_kernel(has_bias, acc_in_output):
    def kernel(x_ref, w_ref, *rest):
        if has_bias:
            b_ref, rest = rest[0], rest[1:]
        o_ref = rest[0]
        acc_ref = o_ref if acc_in_output else rest[1]
        k = pl.program_id(2)

        @pl.when(k == 0)
        def _():
            acc_ref[...] = jnp.zeros_like(acc_ref)

        acc_ref[...] += jnp.dot(x_ref[...], w_ref[...],
                                preferred_element_type=jnp.float32)

        # Epilogue only if we must add bias and/or cast out of the f32 scratch.
        if has_bias or not acc_in_output:
            @pl.when(k == pl.num_programs(2) - 1)
            def _():
                res = acc_ref[...]
                if has_bias:
                    res = res + b_ref[...].astype(jnp.float32)
                o_ref[...] = res.astype(o_ref.dtype)

    return kernel


def linear_allreduce(x, weight, bias=None, mp_group=None, *, compute_dtype=None):
    """Pallas implementation of LinearAllreduce.forward.

    x:      [..., K]
    weight: [K, N]
    bias:   [N] or None
    compute_dtype: optionally cast x/weight (e.g. jnp.bfloat16) before the
        kernel; accumulation stays float32.
    """
    *lead, K = x.shape
    Kw, N = weight.shape
    assert K == Kw, f"in_features mismatch: {K} vs {Kw}"

    if compute_dtype is not None:
        x = x.astype(compute_dtype)
        weight = weight.astype(compute_dtype)

    out_dtype = jnp.result_type(x.dtype, weight.dtype)
    M = math.prod(lead) if lead else 1
    x2d = x.reshape(M, K)

    has_bias = bias is not None
    b2d = bias.reshape(1, N) if has_bias else None

    xs = jnp.dtype(x2d.dtype).itemsize
    ws = jnp.dtype(weight.dtype).itemsize
    os = jnp.dtype(out_dtype).itemsize
    bs = jnp.dtype(b2d.dtype).itemsize if has_bias else 0
    acc_in_output = jnp.dtype(out_dtype) == jnp.dtype(jnp.float32)

    budget, _cap = _vmem_budget()
    tm_align = max(_sublane_min(x2d.dtype), _sublane_min(out_dtype))

    mode, tm, tn, tk = _choose_plan(M, K, N, xs, ws, os, bs, acc_in_output,
                                    budget, tm_align)

    # Megacore: if a big problem collapsed into a single (i, j) output block,
    # split it so both TensorCores get work under the "parallel" axes.
    if _cdiv(M, tm) * _cdiv(N, tn) == 1 and 2.0 * M * N * K >= 1e9:
        if N >= 256:
            tn = max(128, _round_up(_cdiv(N, 2), 128))
        elif M >= 2 * tm_align:
            tm = max(tm_align, _round_up(_cdiv(M, 2), tm_align))

    gm, gn = _cdiv(M, tm), _cdiv(N, tn)

    if mode == "collapsed":
        # Grid order: the operand whose block index is constant along the
        # inner grid axis is DMA'd from HBM exactly once; give that slot to
        # the larger operand (usually the weight).
        weight_first = (K * N * ws) >= (M * K * xs)
        if weight_first:
            grid = (gn, gm)
            x_spec = pl.BlockSpec((tm, K), lambda j, i: (i, 0))
            w_spec = pl.BlockSpec((K, tn), lambda j, i: (0, j))
            o_spec = pl.BlockSpec((tm, tn), lambda j, i: (i, j))
            b_spec = pl.BlockSpec((1, tn), lambda j, i: (0, j))
        else:
            grid = (gm, gn)
            x_spec = pl.BlockSpec((tm, K), lambda i, j: (i, 0))
            w_spec = pl.BlockSpec((K, tn), lambda i, j: (0, j))
            o_spec = pl.BlockSpec((tm, tn), lambda i, j: (i, j))
            b_spec = pl.BlockSpec((1, tn), lambda i, j: (0, j))

        in_specs = [x_spec, w_spec] + ([b_spec] if has_bias else [])
        args = [x2d, weight] + ([b2d] if has_bias else [])
        kernel = _collapsed_kernel(has_bias)
        scratch_shapes = []
        semantics = ("parallel", "parallel")
        footprint = 2 * (tm * K * xs + K * tn * ws + tm * tn * os)
        if has_bias:
            footprint += 2 * tn * bs
    else:
        # Large-K fallback: tile K (innermost, "arbitrary"); accumulator stays
        # resident in the output block (f32 out) or an f32 scratch otherwise.
        # Only K is zero-padded: contraction-axis fringe garbage would corrupt
        # results, while M/N fringes are handled by masked edge stores.
        Kp = _round_up(K, tk)
        if Kp != K:
            x2d = jnp.pad(x2d, ((0, 0), (0, Kp - K)))
            weight = jnp.pad(weight, ((0, Kp - K), (0, 0)))
        gk = Kp // tk
        grid = (gm, gn, gk)
        in_specs = [pl.BlockSpec((tm, tk), lambda i, j, k: (i, k)),
                    pl.BlockSpec((tk, tn), lambda i, j, k: (k, j))]
        args = [x2d, weight]
        if has_bias:
            in_specs.append(pl.BlockSpec((1, tn), lambda i, j, k: (0, j)))
            args.append(b2d)
        o_spec = pl.BlockSpec((tm, tn), lambda i, j, k: (i, j))
        kernel = _tiled_kernel(has_bias, acc_in_output)
        scratch_shapes = [] if acc_in_output else [pltpu.VMEM((tm, tn), jnp.float32)]
        semantics = ("parallel", "parallel", "arbitrary")
        footprint = 2 * (tm * tk * xs + tk * tn * ws + tm * tn * os)
        if has_bias:
            footprint += 2 * tn * bs
        if not acc_in_output:
            footprint += tm * tn * 4

    vmem_limit = int(max(32 << 20, min(footprint + (8 << 20), budget)))

    out2d = pl.pallas_call(
        kernel,
        out_shape=jax.ShapeDtypeStruct((M, N), out_dtype),
        grid_spec=pltpu.PrefetchScalarGridSpec(
            num_scalar_prefetch=0,
            grid=grid,
            in_specs=in_specs,
            out_specs=o_spec,
            scratch_shapes=scratch_shapes,
        ),
        compiler_params=pltpu.CompilerParams(
            dimension_semantics=semantics,
            vmem_limit_bytes=vmem_limit,
        ),
    )(*args)

    out = out2d.reshape(*lead, N)

    if mp_group is not None:
        # TODO(synk): tensor-parallel all-reduce (jax.lax.psum under shard_map,
        # or an in-kernel ICI ring via pltpu.make_async_remote_copy overlapped
        # with the grid steps); single device here, so it is the identity.
        pass

    return out


if __name__ == "__main__":
    key = jax.random.PRNGKey(0)
    k_x, k_w, k_b, k_x2, k_w2 = jax.random.split(key, 5)

    # Test 1: tile-aligned-ish shapes, with bias.
    batch, seq, hidden_in, hidden_out = 2, 8, 256, 256
    x = jax.random.normal(k_x, (batch, seq, hidden_in), dtype=jnp.float32)
    weight = jax.random.normal(k_w, (hidden_in, hidden_out), dtype=jnp.float32) * 0.02
    bias = jax.random.normal(k_b, (hidden_out,), dtype=jnp.float32) * 0.1

    out = jax.block_until_ready(linear_allreduce(x, weight, bias=bias, mp_group=None))
    ref = jnp.matmul(x, weight) + bias
    assert out.shape == (batch, seq, hidden_out)
    assert jnp.allclose(out, ref, atol=1e-3, rtol=1e-3), "mismatch vs reference (test 1)"

    # Test 2: ragged (non-tile-aligned) shapes, no bias -> exercises the
    # full-dim blocks / masked-store path and the bias-free specialization.
    x2 = jax.random.normal(k_x2, (3, 5, 200), dtype=jnp.float32)
    w2 = jax.random.normal(k_w2, (200, 136), dtype=jnp.float32) * 0.02
    out2 = jax.block_until_ready(linear_allreduce(x2, w2, bias=None, mp_group=None))
    ref2 = jnp.matmul(x2, w2)
    assert out2.shape == (3, 5, 136)
    assert jnp.allclose(out2, ref2, atol=1e-3, rtol=1e-3), "mismatch vs reference (test 2)"

    print("KERNEL_OK")
</pallas_src>

<mosaic_0001>
module attributes {stable_mosaic.version = 11 : i64} {
  func.func @kernel(%arg0: i32, %arg1: i32, %arg2: memref<16x256xf32, #tpu.memory_space<vmem>>, %arg3: memref<256x256xf32, #tpu.memory_space<vmem>>, %arg4: memref<1x256xf32, #tpu.memory_space<vmem>>, %arg5: memref<16x256xf32, #tpu.memory_space<vmem>>) attributes {dimension_semantics = [#tpu.dimension_semantics<parallel>, #tpu.dimension_semantics<parallel>], iteration_bounds = array<i64: 1, 1>, scalar_prefetch = 0 : i64, scratch_operands = 0 : i64, tpu.core_type = #tpu.core_type<tc>, window_params = [{transform_indices = @transform_0, window_bounds = array<i64: 16, 256>}, {transform_indices = @transform_1, window_bounds = array<i64: 256, 256>}, {transform_indices = @transform_2, window_bounds = array<i64: 1, 256>}, {transform_indices = @transform_3, window_bounds = array<i64: 16, 256>}]} {
    %c0 = arith.constant 0 : index
    %c0_0 = arith.constant 0 : index
    %0 = vector.load %arg2[%c0, %c0_0] : memref<16x256xf32, #tpu.memory_space<vmem>>, vector<16x256xf32>
    %c0_1 = arith.constant 0 : index
    %c0_2 = arith.constant 0 : index
    %1 = vector.load %arg3[%c0_1, %c0_2] : memref<256x256xf32, #tpu.memory_space<vmem>>, vector<256x256xf32>
    %cst = arith.constant dense<0.000000e+00> : vector<16x256xf32>
    %2 = tpu.matmul %0, %1, %cst {dimension_numbers = #tpu.dot_dimension_numbers<[1], [0], [0], [1], [0, 0, 1, 1], [], []>} : vector<16x256xf32>, vector<256x256xf32>, vector<16x256xf32> -> vector<16x256xf32>
    %c0_3 = arith.constant 0 : index
    %c0_4 = arith.constant 0 : index
    %3 = vector.load %arg4[%c0_3, %c0_4] : memref<1x256xf32, #tpu.memory_space<vmem>>, vector<1x256xf32>
    %4 = vector.broadcast %3 : vector<1x256xf32> to vector<16x256xf32>
    %5 = arith.addf %2, %4 : vector<16x256xf32>
    %c0_5 = arith.constant 0 : index
    %c0_6 = arith.constant 0 : index
    %6 = vector.load %arg5[%c0_5, %c0_6] : memref<16x256xf32, #tpu.memory_space<vmem>>, vector<16x256xf32>
    tpu.vector_store %arg5[%c0_5, %c0_6], %5 {strides = array<i32>} : memref<16x256xf32, #tpu.memory_space<vmem>>, vector<16x256xf32>,
    return
  }
  func.func @transform_0(%arg0: i32, %arg1: i32) -> (i32, i32) {
    %c0_i32 = arith.constant 0 : i32
    %c0_i32_0 = arith.constant 0 : i32
    return %arg1, %c0_i32 : i32, i32
  }
  func.func @transform_1(%arg0: i32, %arg1: i32) -> (i32, i32) {
    %c0_i32 = arith.constant 0 : i32
    %c0_i32_0 = arith.constant 0 : i32
    return %c0_i32, %arg0 : i32, i32
  }
  func.func @transform_2(%arg0: i32, %arg1: i32) -> (i32, i32) {
    %c0_i32 = arith.constant 0 : i32
    %c0_i32_0 = arith.constant 0 : i32
    return %c0_i32, %arg0 : i32, i32
  }
  func.func @transform_3(%arg0: i32, %arg1: i32) -> (i32, i32) {
    %c0_i32 = arith.constant 0 : i32
    return %arg1, %arg0 : i32, i32
  }
}

</mosaic_0001>

<llo_original>
// kernel: tpu_custom_call.1
$region0: #{tpu_custom_call.1}
  #allocation0 [shape = 'u32[]', space=smem, size = 0x4, offset = 0x4, fixed_abs, tag = 'smem constant byte address 0x4 - core index']
  #allocation1 [shape = 'u32[144,128]{1,0:T(1,128)}', space=vmem, size = 0x12000, scoped, tag = 'internal scratch']
  %s0 = inlined_call_operand.hbm [shape: f32[16,256], index: 0, kind: input, shape index: {}]
  %s1 = inlined_call_operand.hbm [shape: f32[256,256], index: 1, kind: input, shape index: {}]
  %s2 = inlined_call_operand.vmem [shape: f32[1,256], index: 2, kind: input, shape index: {}]
  %s3 = inlined_call_operand.hbm [shape: f32[16,256], index: 3, kind: output, shape index: {}]
  %s4 = sld [smem:[#allocation0]]
  $region30: #{tpu_custom_call.1} parent=0
    _
  %s6 = ssub.s32 1, %s4
  %s7 = scalar_select 0, %s6, %s4
  $region1: #{tpu_custom_call.1} parent=0
    #allocation2 [shape = 'u8[16384]{0}', space=vmem, size = 0x4000, scoped, tag = 'input window, operand 0, single buffered']
    #allocation3 [shape = 's32[1]{0}', space=sflag, size = 0x4, scoped, tag = 'scoped memory for tpu_custom_call.1']
    #allocation4 [shape = 's32[1]{0}', space=sflag, size = 0x4, scoped, tag = 'scoped memory for tpu_custom_call.1']
    #allocation5 [shape = 'u8[262144]{0}', space=vmem, size = 0x40000, scoped, tag = 'input window, operand 1, single buffered']
    #allocation6 [shape = 's32[1]{0}', space=sflag, size = 0x4, scoped, tag = 'scoped memory for tpu_custom_call.1']
    #allocation7 [shape = 'u8[16384]{0}', space=vmem, size = 0x4000, scoped, tag = 'output window, operand 0, single buffered']
    %8 = vsyncpa [#allocation3], 0
    %9 = vsyncpa [#allocation6], 0
    %10 = vsyncpa [#allocation4], 0
    // Predicated region
    $region2: #{tpu_custom_call.1} parent=1 // pred_check
      _
    $region3: #{tpu_custom_call.1} parent=1 // pred_check_branch
      %12 = sbr.rel (0) target = $region5
    $region4: #{tpu_custom_call.1} parent=1 // pred_region
      %s14 = ssub.s32 512, 512
      %15 = vsyncadd [#allocation3], %s14
      %s16 = sshll.u32 [#allocation2], 4
      %s17 = int_to_ptr.vmem [resolvable:$true] %s16
      %22 = dma.hbm_to_vmem [thread:$0]  %s0, 512, %s17, [#allocation3], 256, 256, 16
    $region5: #{tpu_custom_call.1} parent=1 // pred_fallthru
      _
    // Predicated region
    $region6: #{tpu_custom_call.1} parent=1 // pred_check
      _
    $region7: #{tpu_custom_call.1} parent=1 // pred_check_branch
      %24 = sbr.rel (0) target = $region9
    $region8: #{tpu_custom_call.1} parent=1 // pred_region
      %s26 = ssub.s32 8192, 8192
      %27 = vsyncadd [#allocation6], %s26
      %s28 = sshll.u32 [#allocation5], 4
      %s29 = int_to_ptr.vmem [resolvable:$true] %s28
      %34 = dma.hbm_to_vmem [thread:$0]  %s1, 8192, %s29, [#allocation6], 256, 256, 16
    $region9: #{tpu_custom_call.1} parent=1 // pred_fallthru
      _
    // Predicated region
    $region10: #{tpu_custom_call.1} parent=1 // pred_check
      _
    $region11: #{tpu_custom_call.1} parent=1 // pred_check_branch
      %36 = sbr.rel (0) target = $region13
    $region12: #{tpu_custom_call.1} parent=1 // pred_region
      _
    $region13: #{tpu_custom_call.1} parent=1 // pred_fallthru
      _
    // Predicated region
    $region14: #{tpu_custom_call.1} parent=1 // pred_check
      _
    $region15: #{tpu_custom_call.1} parent=1 // pred_check_branch
      %38 = sbr.rel (0) target = $region17
    $region16: #{tpu_custom_call.1} parent=1 // pred_region
      %39 = dma.done [#allocation3], 512
    $region17: #{tpu_custom_call.1} parent=1 // pred_fallthru
      _
    // Predicated region
    $region18: #{tpu_custom_call.1} parent=1 // pred_check
      _
    $region19: #{tpu_custom_call.1} parent=1 // pred_check_branch
      %41 = sbr.rel (0) target = $region21
    $region20: #{tpu_custom_call.1} parent=1 // pred_region
      %42 = dma.done [#allocation6], 8192
    $region21: #{tpu_custom_call.1} parent=1 // pred_fallthru
      _
    %v43 = vld [vmem:[#allocation2] sm:$0xff]
    %v44 = vld [vmem:[#allocation2 + $0x8] sm:$0xff]
    %v45 = vld [vmem:[#allocation2 + $0x10] sm:$0xff]
    %v46 = vld [vmem:[#allocation2 + $0x18] sm:$0xff]
    %v47 = vld [vmem:[#allocation5] sm:$0xff]
    %v48 = vld [vmem:[#allocation5 + $0x8] sm:$0xff]
    %v49 = vld [vmem:[#allocation5 + $0x10] sm:$0xff]
    %v50 = vld [vmem:[#allocation5 + $0x18] sm:$0xff]
    %v51 = vld [vmem:[#allocation5 + $0x20] sm:$0xff]
    %v52 = vld [vmem:[#allocation5 + $0x28] sm:$0xff]
    %v53 = vld [vmem:[#allocation5 + $0x30] sm:$0xff]
    %v54 = vld [vmem:[#allocation5 + $0x38] sm:$0xff]
    %v55 = vld [vmem:[#allocation5 + $0x40] sm:$0xff]
    %v56 = vld [vmem:[#allocation5 + $0x48] sm:$0xff]
    %v57 = vld [vmem:[#allocation5 + $0x50] sm:$0xff]
    %v58 = vld [vmem:[#allocation5 + $0x58] sm:$0xff]
    %v59 = vld [vmem:[#allocation5 + $0x60] sm:$0xff]
    %v60 = vld [vmem:[#allocation5 + $0x68] sm:$0xff]
    %v61 = vld [vmem:[#allocation5 + $0x70] sm:$0xff]
    %v62 = vld [vmem:[#allocation5 + $0x78] sm:$0xff]
    %v63 = vld [vmem:[#allocation5 + $0x80] sm:$0xff]
    %v64 = vld [vmem:[#allocation5 + $0x88] sm:$0xff]
    %v65 = vld [vmem:[#allocation5 + $0x90] sm:$0xff]
    %v66 = vld [vmem:[#allocation5 + $0x98] sm:$0xff]
    %v67 = vld [vmem:[#allocation5 + $0xa0] sm:$0xff]
    %v68 = vld [vmem:[#allocation5 + $0xa8] sm:$0xff]
    %v69 = vld [vmem:[#allocation5 + $0xb0] sm:$0xff]
    %v70 = vld [vmem:[#allocation5 + $0xb8] sm:$0xff]
    %v71 = vld [vmem:[#allocation5 + $0xc0] sm:$0xff]
    %v72 = vld [vmem:[#allocation5 + $0xc8] sm:$0xff]
    %v73 = vld [vmem:[#allocation5 + $0xd0] sm:$0xff]
    %v74 = vld [vmem:[#allocation5 + $0xd8] sm:$0xff]
    %v75 = vld [vmem:[#allocation5 + $0xe0] sm:$0xff]
    %v76 = vld [vmem:[#allocation5 + $0xe8] sm:$0xff]
    %v77 = vld [vmem:[#allocation5 + $0xf0] sm:$0xff]
    %v78 = vld [vmem:[#allocation5 + $0xf8] sm:$0xff]
    %v79 = vld [vmem:[#allocation5 + $0x100] sm:$0xff]
    %v80 = vld [vmem:[#allocation5 + $0x108] sm:$0xff]
    %v81 = vld [vmem:[#allocation5 + $0x110] sm:$0xff]
    %v82 = vld [vmem:[#allocation5 + $0x118] sm:$0xff]
    %v83 = vld [vmem:[#allocation5 + $0x120] sm:$0xff]
    %v84 = vld [vmem:[#allocation5 + $0x128] sm:$0xff]
    %v85 = vld [vmem:[#allocation5 + $0x130] sm:$0xff]
    %v86 = vld [vmem:[#allocation5 + $0x138] sm:$0xff]
    %v87 = vld [vmem:[#allocation5 + $0x140] sm:$0xff]
    %v88 = vld [vmem:[#allocation5 + $0x148] sm:$0xff]
    %v89 = vld [vmem:[#allocation5 + $0x150] sm:$0xff]
    %v90 = vld [vmem:[#allocation5 + $0x158] sm:$0xff]
    %v91 = vld [vmem:[#allocation5 + $0x160] sm:$0xff]
    %v92 = vld [vmem:[#allocation5 + $0x168] sm:$0xff]
    %v93 = vld [vmem:[#allocation5 + $0x170] sm:$0xff]
    %v94 = vld [vmem:[#allocation5 + $0x178] sm:$0xff]
    %v95 = vld [vmem:[#allocation5 + $0x180] sm:$0xff]
    %v96 = vld [vmem:[#allocation5 + $0x188] sm:$0xff]
    %v97 = vld [vmem:[#allocation5 + $0x190] sm:$0xff]
    %v98 = vld [vmem:[#allocation5 + $0x198] sm:$0xff]
    %v99 = vld [vmem:[#allocation5 + $0x1a0] sm:$0xff]
    %v100 = vld [vmem:[#allocation5 + $0x1a8] sm:$0xff]
    %v101 = vld [vmem:[#allocation5 + $0x1b0] sm:$0xff]
    %v102 = vld [vmem:[#allocation5 + $0x1b8] sm:$0xff]
    %v103 = vld [vmem:[#allocation5 + $0x1c0] sm:$0xff]
    %v104 = vld [vmem:[#allocation5 + $0x1c8] sm:$0xff]
    %v105 = vld [vmem:[#allocation5 + $0x1d0] sm:$0xff]
    %v106 = vld [vmem:[#allocation5 + $0x1d8] sm:$0xff]
    %v107 = vld [vmem:[#allocation5 + $0x1e0] sm:$0xff]
    %v108 = vld [vmem:[#allocation5 + $0x1e8] sm:$0xff]
    %v109 = vld [vmem:[#allocation5 + $0x1f0] sm:$0xff]
    %v110 = vld [vmem:[#allocation5 + $0x1f8] sm:$0xff]
    %v111 = vld [vmem:[%s2] sm:$0x3]
    %v113 = vlaneseq
    %v114 = vshrl.u32 %v113, 7
    %v115 = vsub.s32 0, %v114
    %v116 = vrot.slane %v111, %v115
    %v117 = vlaneseq
    %v118 = vshrl.u32 %v117, 7
    %v119 = vsub.s32 1, %v118
    %v120 = vrot.slane %v111, %v119
    %123 = vmatprep.subr.mxu0 %v78
    %124 = vmatpush1.msra.mxu0 %v77
    %125 = vmatprep.subr.mxu0 %v76
    %126 = vmatpush1.msra.mxu0 %v75
    %127 = vmatprep.subr.mxu0 %v74
    %128 = vmatpush1.msra.mxu0 %v73
    %129 = vmatprep.subr.mxu0 %v72
    %130 = vmatpush1.msra.mxu0 %v71
    %131 = vmatprep.subr.mxu0 %v70
    %132 = vmatpush1.msra.mxu0 %v69
    %133 = vmatprep.subr.mxu0 %v68
    %134 = vmatpush1.msra.mxu0 %v67
    %135 = vmatprep.subr.mxu0 %v66
    %136 = vmatpush1.msra.mxu0 %v65
    %137 = vmatprep.subr.mxu0 %v64
    %138 = vmatpush1.msra.mxu0 %v63
    %139 = vmatprep.subr.mxu0 %v62
    %140 = vmatpush1.msra.mxu0 %v61
    %141 = vmatprep.subr.mxu0 %v60
    %142 = vmatpush1.msra.mxu0 %v59
    %143 = vmatprep.subr.mxu0 %v58
    %144 = vmatpush1.msra.mxu0 %v57
    %145 = vmatprep.subr.mxu0 %v56
    %146 = vmatpush1.msra.mxu0 %v55
    %147 = vmatprep.subr.mxu0 %v54
    %148 = vmatpush1.msra.mxu0 %v53
    %149 = vmatprep.subr.mxu0 %v52
    %150 = vmatpush1.msra.mxu0 %v51
    %151 = vmatprep.subr.mxu0 %v50
    %152 = vmatpush1.msra.mxu0 %v49
    %153 = vmatprep.subr.mxu0 %v48
    %154 = vmatpush1.msra.mxu0 %v47
    %155 = vmatprep.subr.mxu0 %v110
    %156 = vmatpush2.msra.mxu0 %v109
    %157 = vmatprep.subr.mxu0 %v108
    %158 = vmatpush2.msra.mxu0 %v107
    %159 = vmatprep.subr.mxu0 %v106
    %160 = vmatpush2.msra.mxu0 %v105
    %161 = vmatprep.subr.mxu0 %v104
    %162 = vmatpush2.msra.mxu0 %v103
    %163 = vmatprep.subr.mxu0 %v102
    %164 = vmatpush2.msra.mxu0 %v101
    %165 = vmatprep.subr.mxu0 %v100
    %166 = vmatpush2.msra.mxu0 %v99
    %167 = vmatprep.subr.mxu0 %v98
    %168 = vmatpush2.msra.mxu0 %v97
    %169 = vmatprep.subr.mxu0 %v96
    %170 = vmatpush2.msra.mxu0 %v95
    %171 = vmatprep.subr.mxu0 %v94
    %172 = vmatpush2.msra.mxu0 %v93
    %173 = vmatprep.subr.mxu0 %v92
    %174 = vmatpush2.msra.mxu0 %v91
    %175 = vmatprep.subr.mxu0 %v90
    %176 = vmatpush2.msra.mxu0 %v89
    %177 = vmatprep.subr.mxu0 %v88
    %178 = vmatpush2.msra.mxu0 %v87
    %179 = vmatprep.subr.mxu0 %v86
    %180 = vmatpush2.msra.mxu0 %v85
    %181 = vmatprep.subr.mxu0 %v84
    %182 = vmatpush2.msra.mxu0 %v83
    %183 = vmatprep.subr.mxu0 %v82
    %184 = vmatpush2.msra.mxu0 %v81
    %185 = vmatprep.subr.mxu0 %v80
    %186 = vmatpush2.msra.mxu0 %v79
    %187 = vmatprep.mubr.f32.mxu0 %v44
    %188 = vmatmul.mubr.f32.gmra.mxu0 %v43
    %v189 = vpop.f32.mrf.mxu0
    %v190 = vadd.f32 %v116, %v189
    %v191 = vpop.f32.mrf.mxu0
    %v192 = vadd.f32 %v120, %v191
    %193 = vmatprep.mubr.f32.mxu0 %v46
    %194 = vmatmul.mubr.f32.gmra.mxu0 %v45
    %v195 = vpop.f32.mrf.mxu0
    %v196 = vadd.f32 %v116, %v195
    %v197 = vpop.f32.mrf.mxu0
    %v198 = vadd.f32 %v120, %v197
    %199 = vdwg.mxu0
    %200 = vst [vmem:[#allocation7] sm:$0xff] %v190
    %201 = vst [vmem:[#allocation7 + $0x8] sm:$0xff] %v192
    %202 = vst [vmem:[#allocation7 + $0x10] sm:$0xff] %v196
    %203 = vst [vmem:[#allocation7 + $0x18] sm:$0xff] %v198
    // Predicated region
    $region22: #{tpu_custom_call.1} parent=1 // pred_check
      _
    $region23: #{tpu_custom_call.1} parent=1 // pred_check_branch
      %205 = sbr.rel (0) target = $region25
    $region24: #{tpu_custom_call.1} parent=1 // pred_region
      %s207 = ssub.s32 512, 512
      %208 = vsyncadd [#allocation4], %s207
      %s209 = sshll.u32 [#allocation7], 4
      %s210 = int_to_ptr.vmem [resolvable:$true] %s209
      %215 = dma.vmem_to_hbm [thread:$0]  %s210, 512, %s3, [#allocation4], 256, 256, 16
    $region25: #{tpu_custom_call.1} parent=1 // pred_fallthru
      _
    // Predicated region
    $region26: #{tpu_custom_call.1} parent=1 // pred_check
      _
    $region27: #{tpu_custom_call.1} parent=1 // pred_check_branch
      %217 = sbr.rel (0) target = $region29
    $region28: #{tpu_custom_call.1} parent=1 // pred_region
      %218 = dma.done [#allocation4], 512
    $region29: #{tpu_custom_call.1} parent=1 // pred_fallthru
      _
    %219 = vsyncpa [#allocation3], 1
    %220 = vsyncpa [#allocation6], 1
    %221 = vsyncpa [#allocation4], 1

</llo_original>
